<compile_context>
chip_gen: v6e
topology: v6e:2x2x1
jax: 0.10.0
libtpu: 0.0.40
codegen_flags: <defaults>
</compile_context>

<pallas_src>
import functools
import math

import jax
import jax.numpy as jnp
from jax.experimental import pallas as pl
from jax.experimental.pallas import tpu as pltpu

LN_EPS = 1e-5                      # nn.TransformerDecoderLayer default layer_norm_eps
NEG_INF = -1e30                    # finite additive mask value (avoids NaN rows)
_VMEM_BUDGET = 24 * 1024 * 1024    # conservative per-kernel block budget (fits v7x)
_VMEM_LIMIT = 48 * 1024 * 1024     # explicit scoped-VMEM request (< physical on all chips)


# ---------------------------------------------------------------------------
# Block-size helpers
# ---------------------------------------------------------------------------
def _round_up(x, m):
    return (x + m - 1) // m * m


def _pick_block(dim, target, unit):
    """Largest block <= target that is a multiple of `unit` and divides `dim`;
    falls back to the full dim (always legal)."""
    if dim <= target:
        return dim
    b = (target // unit) * unit
    while b >= unit:
        if dim % b == 0:
            return b
        b -= unit
    return dim


def _row_block(M, target=256):
    """Pick an MXU-friendly row block and the padded row count (bm, M_pad)."""
    if M <= target:
        bm = _round_up(M, 8)
        return bm, bm
    if M % 256 == 0:
        return 256, M
    if M % 128 == 0:
        return 128, M
    return 128, _round_up(M, 128)


def _pad_rows(x, m_pad):
    M = x.shape[0]
    if m_pad == M:
        return x
    return jnp.pad(x, ((0, m_pad - M), (0, 0)))


# ---------------------------------------------------------------------------
# Kernel 1: tiled matmul (+ optional fused bias / residual-add / LayerNorm)
# ---------------------------------------------------------------------------
def _matmul_kernel(*refs, fuse_ln, eps, n_k):
    x_ref, w_ref, b_ref = refs[0], refs[1], refs[2]
    if fuse_ln:
        res_ref, g_ref, beta_ref = refs[3], refs[4], refs[5]
        o_ref, acc_ref = refs[6], refs[7]
    else:
        o_ref, acc_ref = refs[3], refs[4]

    @pl.when(pl.program_id(2) == 0)
    def _():
        acc_ref[...] = jnp.zeros_like(acc_ref)

    acc_ref[...] += jnp.dot(x_ref[...].astype(jnp.bfloat16), w_ref[...],
                            preferred_element_type=jnp.float32)

    @pl.when(pl.program_id(2) == n_k - 1)
    def _():
        y = acc_ref[...] + b_ref[...]
        if fuse_ln:
            y = y + res_ref[...]
            mu = jnp.mean(y, axis=-1, keepdims=True)
            yc = y - mu
            var = jnp.mean(yc * yc, axis=-1, keepdims=True)
            y = yc * jax.lax.rsqrt(var + eps) * g_ref[...] + beta_ref[...]
        o_ref[...] = y.astype(o_ref.dtype)


def matmul(x, w, b, *, residual=None, gamma=None, beta=None, out_dtype=jnp.float32):
    """x: (M, K); w: (K, N) pre-packed bf16; b: (N,) f32.
    With residual/gamma/beta: out = LayerNorm(x @ w + b + residual)."""
    M, K = x.shape
    N = w.shape[1]
    fuse_ln = residual is not None
    bm, Mp = _row_block(M)
    bn = N if fuse_ln else _pick_block(N, 512, 128)     # LN epilogue needs full features
    bk = _pick_block(K, 512 if fuse_ln else 1024, 128)

    x_bytes = jnp.dtype(x.dtype).itemsize
    out_bytes = jnp.dtype(out_dtype).itemsize

    def est_vmem(bm_, bk_):
        v = 2 * bm_ * bk_ * x_bytes          # x blocks (double buffered)
        v += 2 * bk_ * bn * 2                # bf16 weight blocks
        v += 2 * bm_ * bn * out_bytes        # output blocks
        v += bm_ * bn * 4                    # f32 accumulator
        v += (4 if fuse_ln else 1) * 2 * bn * 4
        if fuse_ln:
            v += 2 * bm_ * bn * 4            # residual blocks
        return v

    while est_vmem(bm, bk) > _VMEM_BUDGET:
        if fuse_ln and bm >= 128 and Mp % (bm // 2) == 0:
            bm //= 2
        elif bk >= 256 and (bk // 2) % 128 == 0 and K % (bk // 2) == 0:
            bk //= 2
        elif bm >= 128 and Mp % (bm // 2) == 0:
            bm //= 2
        else:
            break

    n_k = K // bk
    xp = _pad_rows(x, Mp)
    args = [xp, w, b.reshape(1, N)]
    in_specs = [
        pl.BlockSpec((bm, bk), lambda i, j, k: (i, k)),
        pl.BlockSpec((bk, bn), lambda i, j, k: (k, j)),
        pl.BlockSpec((1, bn), lambda i, j, k: (0, j)),
    ]
    if fuse_ln:
        args += [_pad_rows(residual, Mp), gamma.reshape(1, N), beta.reshape(1, N)]
        in_specs += [
            pl.BlockSpec((bm, bn), lambda i, j, k: (i, j)),
            pl.BlockSpec((1, bn), lambda i, j, k: (0, j)),
            pl.BlockSpec((1, bn), lambda i, j, k: (0, j)),
        ]

    cost = pl.CostEstimate(
        flops=2 * Mp * N * K,
        transcendentals=0,
        bytes_accessed=Mp * K * x_bytes + K * N * 2 + Mp * N * out_bytes
                       + (2 * Mp * N * 4 if fuse_ln else 0))

    out = pl.pallas_call(
        functools.partial(_matmul_kernel, fuse_ln=fuse_ln, eps=LN_EPS, n_k=n_k),
        out_shape=jax.ShapeDtypeStruct((Mp, N), out_dtype),
        grid=(Mp // bm, N // bn, n_k),
        in_specs=in_specs,
        out_specs=pl.BlockSpec((bm, bn), lambda i, j, k: (i, j)),
        scratch_shapes=[pltpu.VMEM((bm, bn), jnp.float32)],
        compiler_params=pltpu.CompilerParams(
            dimension_semantics=("parallel", "parallel", "arbitrary"),
            vmem_limit_bytes=_VMEM_LIMIT),
        cost_estimate=cost,
    )(*args)
    return out if Mp == M else out[:M]


# ---------------------------------------------------------------------------
# Kernel 2: fused FFN  (linear1 + ReLU + linear2 + residual + LayerNorm)
# ---------------------------------------------------------------------------
def _ffn_kernel(x_ref, w1_ref, b1_ref, w2_ref, b2_ref, g_ref, beta_ref,
                o_ref, acc_ref, xb_ref, *, n_k, eps):
    k = pl.program_id(1)

    @pl.when(k == 0)
    def _():
        acc_ref[...] = jnp.zeros_like(acc_ref)
        xb_ref[...] = x_ref[...].astype(jnp.bfloat16)   # cast LHS once, reuse for all k

    h = jnp.dot(xb_ref[...], w1_ref[...], preferred_element_type=jnp.float32)
    h = jnp.maximum(h + b1_ref[...], 0.0)
    acc_ref[...] += jnp.dot(h.astype(jnp.bfloat16), w2_ref[...],
                            preferred_element_type=jnp.float32)

    @pl.when(k == n_k - 1)
    def _():
        y = acc_ref[...] + b2_ref[...] + x_ref[...]
        mu = jnp.mean(y, axis=-1, keepdims=True)
        yc = y - mu
        var = jnp.mean(yc * yc, axis=-1, keepdims=True)
        y = yc * jax.lax.rsqrt(var + eps) * g_ref[...] + beta_ref[...]
        o_ref[...] = y.astype(o_ref.dtype)


def ffn(x2d, p):
    M, D = x2d.shape
    mlp = p["w1"].shape[1]
    bm, Mp = _row_block(M)
    bkk = _pick_block(mlp, 512, 128)

    def est_vmem(bm_, bkk_):
        return (2 * bm_ * D * 4 + bm_ * D * 2          # x f32 (x2 buf) + bf16 scratch
                + 2 * D * bkk_ * 2 + 2 * bkk_ * D * 2  # w1, w2 bf16
                + 2 * bm_ * D * 4 + bm_ * D * 4        # out + accumulator
                + bm_ * bkk_ * 4                       # hidden intermediate
                + 3 * 2 * D * 4 + 2 * bkk_ * 4)

    while est_vmem(bm, bkk) > _VMEM_BUDGET:
        if bm >= 128 and Mp % (bm // 2) == 0:
            bm //= 2
        elif bkk >= 256 and (bkk // 2) % 128 == 0 and mlp % (bkk // 2) == 0:
            bkk //= 2
        else:
            break

    n_k = mlp // bkk
    xp = _pad_rows(x2d, Mp)
    cost = pl.CostEstimate(flops=4 * Mp * D * mlp, transcendentals=0,
                           bytes_accessed=2 * Mp * D * 4 + 4 * D * mlp)

    out = pl.pallas_call(
        functools.partial(_ffn_kernel, n_k=n_k, eps=LN_EPS),
        out_shape=jax.ShapeDtypeStruct((Mp, D), jnp.float32),
        grid=(Mp // bm, n_k),
        in_specs=[
            pl.BlockSpec((bm, D), lambda i, k: (i, 0)),
            pl.BlockSpec((D, bkk), lambda i, k: (0, k)),
            pl.BlockSpec((1, bkk), lambda i, k: (0, k)),
            pl.BlockSpec((bkk, D), lambda i, k: (k, 0)),
            pl.BlockSpec((1, D), lambda i, k: (0, 0)),
            pl.BlockSpec((1, D), lambda i, k: (0, 0)),
            pl.BlockSpec((1, D), lambda i, k: (0, 0)),
        ],
        out_specs=pl.BlockSpec((bm, D), lambda i, k: (i, 0)),
        scratch_shapes=[pltpu.VMEM((bm, D), jnp.float32),
                        pltpu.VMEM((bm, D), jnp.bfloat16)],
        compiler_params=pltpu.CompilerParams(
            dimension_semantics=("parallel", "arbitrary"),
            vmem_limit_bytes=_VMEM_LIMIT),
        cost_estimate=cost,
    )(xp, p["w1"], p["b1"].reshape(1, mlp), p["w2"], p["b2"].reshape(1, D),
      p["norm3_w"].reshape(1, D), p["norm3_b"].reshape(1, D))
    return out if Mp == M else out[:M]


# ---------------------------------------------------------------------------
# Kernel 3: flash-style multi-head attention
#   grid (B, H, q_tile, kv_tile); online softmax with VMEM-resident m/l/acc.
#   1/sqrt(hd) is already folded into the Q projection, so no score scaling here.
# ---------------------------------------------------------------------------
def _flash_attn_kernel(*refs, bq, bk, n_kv, causal, has_mask, has_kp):
    q_ref, k_ref, v_ref = refs[:3]
    idx = 3
    mask_ref = None
    if has_mask:
        mask_ref = refs[idx]
        idx += 1
    kp_ref = None
    if has_kp:
        kp_ref = refs[idx]
        idx += 1
    o_ref = refs[idx]
    m_ref, l_ref, acc_ref = refs[idx + 1], refs[idx + 2], refs[idx + 3]

    qi = pl.program_id(2)
    ki = pl.program_id(3)

    @pl.when(ki == 0)
    def _():
        m_ref[...] = jnp.full_like(m_ref, NEG_INF)
        l_ref[...] = jnp.zeros_like(l_ref)
        acc_ref[...] = jnp.zeros_like(acc_ref)

    def compute():
        q = q_ref[0, 0]                       # (bq, hd) bf16
        k = k_ref[0, 0]                       # (bk, hd) bf16
        # A @ B^T contraction — same dimension_numbers as the canonical Pallas flash kernel.
        s = jax.lax.dot_general(q, k, (((1,), (1,)), ((), ())),
                                preferred_element_type=jnp.float32)
        if has_mask:
            s = s + mask_ref[...]
        if has_kp:
            s = s + kp_ref[0]                 # (1, bk) broadcast over queries
        if causal:
            row = qi * bq + jax.lax.broadcasted_iota(jnp.int32, (bq, bk), 0)
            col = ki * bk + jax.lax.broadcasted_iota(jnp.int32, (bq, bk), 1)
            s = jnp.where(col > row, NEG_INF, s)

        m_prev = m_ref[...]                                   # (bq, 1)
        m_curr = jnp.max(s, axis=-1, keepdims=True)
        m_next = jnp.maximum(m_prev, m_curr)
        alpha = jnp.exp(m_prev - m_next)
        p = jnp.exp(s - m_next)
        l_ref[...] = alpha * l_ref[...] + jnp.sum(p, axis=-1, keepdims=True)
        acc_ref[...] = alpha * acc_ref[...] + jnp.dot(
            p.astype(jnp.bfloat16), v_ref[0, 0], preferred_element_type=jnp.float32)
        m_ref[...] = m_next

    if causal:
        # Skip KV tiles that are entirely above the diagonal.
        @pl.when(ki * bk <= qi * bq + (bq - 1))
        def _():
            compute()
    else:
        compute()

    @pl.when(ki == n_kv - 1)
    def _():
        o_ref[0, 0] = (acc_ref[...] *
                       pl.reciprocal(l_ref[...], approx=True)).astype(o_ref.dtype)


def flash_attention(q, k, v, *, causal=False, attn_mask=None, kp_bias=None,
                    bq=256, bk=256):
    """q, k, v: (B, H, T, hd) bf16; attn_mask: (Tq, Tk) additive f32;
    kp_bias: (B, Tk) additive f32.  Returns (B, H, Tq, hd) bf16."""
    B, H, Tq, hd = q.shape
    Tk = k.shape[2]
    bq = _pick_block(Tq, bq, 8)
    bk = _pick_block(Tk, bk, 128)
    n_q, n_kv = Tq // bq, Tk // bk
    has_mask = attn_mask is not None
    has_kp = kp_bias is not None

    in_specs = [
        pl.BlockSpec((1, 1, bq, hd), lambda b, h, i, j: (b, h, i, 0)),
        pl.BlockSpec((1, 1, bk, hd), lambda b, h, i, j: (b, h, j, 0)),
        pl.BlockSpec((1, 1, bk, hd), lambda b, h, i, j: (b, h, j, 0)),
    ]
    args = [q, k, v]
    if has_mask:
        in_specs.append(pl.BlockSpec((bq, bk), lambda b, h, i, j: (i, j)))
        args.append(attn_mask)
    if has_kp:
        in_specs.append(pl.BlockSpec((1, 1, bk), lambda b, h, i, j: (b, 0, j)))
        args.append(kp_bias.reshape(B, 1, Tk))

    cost = pl.CostEstimate(flops=4 * B * H * Tq * Tk * hd,
                           transcendentals=B * H * Tq * Tk,
                           bytes_accessed=2 * B * H * (2 * Tq + 2 * Tk) * hd)

    kernel = functools.partial(_flash_attn_kernel, bq=bq, bk=bk, n_kv=n_kv,
                               causal=causal, has_mask=has_mask, has_kp=has_kp)

    return pl.pallas_call(
        kernel,
        out_shape=jax.ShapeDtypeStruct((B, H, Tq, hd), jnp.bfloat16),
        grid=(B, H, n_q, n_kv),
        in_specs=in_specs,
        out_specs=pl.BlockSpec((1, 1, bq, hd), lambda b, h, i, j: (b, h, i, 0)),
        scratch_shapes=[pltpu.VMEM((bq, 1), jnp.float32),
                        pltpu.VMEM((bq, 1), jnp.float32),
                        pltpu.VMEM((bq, hd), jnp.float32)],
        compiler_params=pltpu.CompilerParams(
            dimension_semantics=("parallel", "parallel", "parallel", "arbitrary"),
            vmem_limit_bytes=_VMEM_LIMIT),
        cost_estimate=cost,
    )(*args)


# ---------------------------------------------------------------------------
# Decoder layer / stack (nn.TransformerDecoderLayer, norm_first=False)
# ---------------------------------------------------------------------------
def decoder_layer(x2d, mem2d, p, nhead, B, T, S, *, causal, attn_mask, kp_bias):
    D = x2d.shape[1]
    hd = D // nhead

    # --- self-attention (fused QKV projection, scale pre-folded into Q) ---
    qkv = matmul(x2d, p["self_attn"]["w_qkv"], p["self_attn"]["b_qkv"],
                 out_dtype=jnp.bfloat16)
    qkv = qkv.reshape(B, T, 3, nhead, hd).transpose(2, 0, 3, 1, 4)   # (3, B, H, T, hd)
    sa = flash_attention(qkv[0], qkv[1], qkv[2], causal=causal,
                         attn_mask=attn_mask, kp_bias=kp_bias)
    sa = sa.transpose(0, 2, 1, 3).reshape(B * T, D)
    x2d = matmul(sa, p["self_attn"]["w_o"], p["self_attn"]["b_o"],
                 residual=x2d, gamma=p["norm1_w"], beta=p["norm1_b"])

    # --- cross-attention (fused KV projection of memory) ---
    q = matmul(x2d, p["cross_attn"]["w_q"], p["cross_attn"]["b_q"],
               out_dtype=jnp.bfloat16)
    q = q.reshape(B, T, nhead, hd).transpose(0, 2, 1, 3)
    kv = matmul(mem2d, p["cross_attn"]["w_kv"], p["cross_attn"]["b_kv"],
                out_dtype=jnp.bfloat16)
    kv = kv.reshape(B, S, 2, nhead, hd).transpose(2, 0, 3, 1, 4)     # (2, B, H, S, hd)
    ca = flash_attention(q, kv[0], kv[1])
    ca = ca.transpose(0, 2, 1, 3).reshape(B * T, D)
    x2d = matmul(ca, p["cross_attn"]["w_o"], p["cross_attn"]["b_o"],
                 residual=x2d, gamma=p["norm2_w"], beta=p["norm2_b"])

    # --- FFN (single fused kernel) ---
    return ffn(x2d, p)


def transformer_decoder(tgt, memory, params, nhead, *, tgt_mask=None,
                        tgt_key_padding_mask=None, tgt_is_causal=False):
    B, T, D = tgt.shape
    S = memory.shape[1]
    attn_mask = None
    if tgt_mask is not None:
        if tgt_mask.dtype == jnp.bool_:
            attn_mask = jnp.where(tgt_mask, NEG_INF, 0.0).astype(jnp.float32)
        else:
            attn_mask = tgt_mask.astype(jnp.float32)
    kp_bias = None
    if tgt_key_padding_mask is not None:
        kp_bias = jnp.where(tgt_key_padding_mask, NEG_INF, 0.0).astype(jnp.float32)

    x2d = tgt.reshape(B * T, D).astype(jnp.float32)
    mem2d = memory.reshape(B * S, D).astype(jnp.float32)
    for p in params:   # nn.TransformerDecoder(norm=None): no final norm
        x2d = decoder_layer(x2d, mem2d, p, nhead, B, T, S, causal=tgt_is_causal,
                            attn_mask=attn_mask, kp_bias=kp_bias)
    return x2d.reshape(B, T, D)


# ---------------------------------------------------------------------------
# Parameter init (PyTorch layout) and one-time packing into kernel layout
# ---------------------------------------------------------------------------
def init_layer_params(key, d_model, mlp_dim):
    ks = jax.random.split(key, 10)
    w = lambda k, s: jax.random.normal(k, s, jnp.float32) * 0.02
    return {
        "self_attn": {
            "in_proj_weight": w(ks[0], (3 * d_model, d_model)),
            "in_proj_bias":   w(ks[1], (3 * d_model,)),
            "out_proj_weight": w(ks[2], (d_model, d_model)),
            "out_proj_bias":  jnp.zeros((d_model,), jnp.float32),
        },
        "cross_attn": {
            "in_proj_weight": w(ks[3], (3 * d_model, d_model)),
            "in_proj_bias":   w(ks[4], (3 * d_model,)),
            "out_proj_weight": w(ks[5], (d_model, d_model)),
            "out_proj_bias":  jnp.zeros((d_model,), jnp.float32),
        },
        "linear1_w": w(ks[6], (mlp_dim, d_model)),
        "linear1_b": w(ks[7], (mlp_dim,)),
        "linear2_w": w(ks[8], (d_model, mlp_dim)),
        "linear2_b": w(ks[9], (d_model,)),
        "norm1_w": jnp.ones((d_model,), jnp.float32), "norm1_b": jnp.zeros((d_model,), jnp.float32),
        "norm2_w": jnp.ones((d_model,), jnp.float32), "norm2_b": jnp.zeros((d_model,), jnp.float32),
        "norm3_w": jnp.ones((d_model,), jnp.float32), "norm3_b": jnp.zeros((d_model,), jnp.float32),
    }


def pack_layer_params(p, d_model, nhead):
    """One-time pre-pack: PyTorch (Dout, Din) f32 -> (Din, Dout) bf16 for the MXU.
    The 1/sqrt(hd) softmax scale is folded into the Q projection weight & bias."""
    D = d_model
    scale = 1.0 / math.sqrt(D // nhead)
    sa, ca = p["self_attn"], p["cross_attn"]
    w_qkv = jnp.concatenate([sa["in_proj_weight"][:D] * scale,
                             sa["in_proj_weight"][D:]], axis=0)
    b_qkv = jnp.concatenate([sa["in_proj_bias"][:D] * scale, sa["in_proj_bias"][D:]])
    return {
        "self_attn": {
            "w_qkv": w_qkv.T.astype(jnp.bfloat16),                       # (D, 3D)
            "b_qkv": b_qkv,
            "w_o": sa["out_proj_weight"].T.astype(jnp.bfloat16),
            "b_o": sa["out_proj_bias"],
        },
        "cross_attn": {
            "w_q": (ca["in_proj_weight"][:D] * scale).T.astype(jnp.bfloat16),   # (D, D)
            "b_q": ca["in_proj_bias"][:D] * scale,
            "w_kv": ca["in_proj_weight"][D:].T.astype(jnp.bfloat16),            # (D, 2D)
            "b_kv": ca["in_proj_bias"][D:],
            "w_o": ca["out_proj_weight"].T.astype(jnp.bfloat16),
            "b_o": ca["out_proj_bias"],
        },
        "w1": p["linear1_w"].T.astype(jnp.bfloat16), "b1": p["linear1_b"],
        "w2": p["linear2_w"].T.astype(jnp.bfloat16), "b2": p["linear2_b"],
        "norm1_w": p["norm1_w"], "norm1_b": p["norm1_b"],
        "norm2_w": p["norm2_w"], "norm2_b": p["norm2_b"],
        "norm3_w": p["norm3_w"], "norm3_b": p["norm3_b"],
    }


# ---------------------------------------------------------------------------
# Pure-JAX reference (PyTorch semantics, raw parameters, matched bf16 policy)
# ---------------------------------------------------------------------------
def _ref_linear(x, w, b):
    return jnp.dot(x.astype(jnp.bfloat16), w.T.astype(jnp.bfloat16),
                   preferred_element_type=jnp.float32) + b


def _ref_ln(x, g, b, eps=LN_EPS):
    mu = x.mean(-1, keepdims=True)
    xc = x - mu
    var = (xc * xc).mean(-1, keepdims=True)
    return xc * jax.lax.rsqrt(var + eps) * g + b


def _ref_mha(q_in, kv_in, w_in, b_in, w_out, b_out, nhead, bias):
    B, Tq, D = q_in.shape
    Tk = kv_in.shape[1]
    hd = D // nhead
    q = _ref_linear(q_in, w_in[:D], b_in[:D])
    k = _ref_linear(kv_in, w_in[D:2 * D], b_in[D:2 * D])
    v = _ref_linear(kv_in, w_in[2 * D:], b_in[2 * D:])
    q = q.reshape(B, Tq, nhead, hd).transpose(0, 2, 1, 3)
    k = k.reshape(B, Tk, nhead, hd).transpose(0, 2, 1, 3)
    v = v.reshape(B, Tk, nhead, hd).transpose(0, 2, 1, 3)
    s = jnp.einsum("bhqd,bhkd->bhqk", q.astype(jnp.bfloat16), k.astype(jnp.bfloat16),
                   preferred_element_type=jnp.float32) / math.sqrt(hd)
    if bias is not None:
        s = s + bias[:, None]
    p = jax.nn.softmax(s, axis=-1)
    o = jnp.einsum("bhqk,bhkd->bhqd", p.astype(jnp.bfloat16), v.astype(jnp.bfloat16),
                   preferred_element_type=jnp.float32)
    o = o.transpose(0, 2, 1, 3).reshape(B, Tq, D)
    return _ref_linear(o, w_out, b_out)


def _ref_bias(B, Tq, Tk, causal, attn_mask, kp_mask):
    if not causal and attn_mask is None and kp_mask is None:
        return None
    bias = jnp.zeros((B, Tq, Tk), jnp.float32)
    if causal:
        cm = jnp.triu(jnp.ones((Tq, Tk), jnp.bool_), k=1)
        bias = bias + jnp.where(cm, NEG_INF, 0.0)[None]
    if attn_mask is not None:
        am = (jnp.where(attn_mask, NEG_INF, 0.0) if attn_mask.dtype == jnp.bool_
              else attn_mask.astype(jnp.float32))
        bias = bias + am[None]
    if kp_mask is not None:
        bias = bias + jnp.where(kp_mask, NEG_INF, 0.0).astype(jnp.float32)[:, None, :]
    return bias


def ref_transformer_decoder(tgt, memory, raw_params, nhead, *, causal=False,
                            attn_mask=None, kp_mask=None):
    B, T, D = tgt.shape
    bias = _ref_bias(B, T, T, causal, attn_mask, kp_mask)
    x = tgt
    for p in raw_params:
        sa_p, ca_p = p["self_attn"], p["cross_attn"]
        sa = _ref_mha(x, x, sa_p["in_proj_weight"], sa_p["in_proj_bias"],
                      sa_p["out_proj_weight"], sa_p["out_proj_bias"], nhead, bias)
        x = _ref_ln(x + sa, p["norm1_w"], p["norm1_b"])
        ca = _ref_mha(x, memory, ca_p["in_proj_weight"], ca_p["in_proj_bias"],
                      ca_p["out_proj_weight"], ca_p["out_proj_bias"], nhead, None)
        x = _ref_ln(x + ca, p["norm2_w"], p["norm2_b"])
        h = jnp.maximum(_ref_linear(x, p["linear1_w"], p["linear1_b"]), 0.0)
        h = _ref_linear(h, p["linear2_w"], p["linear2_b"])
        x = _ref_ln(x + h, p["norm3_w"], p["norm3_b"])
    return x


# ---------------------------------------------------------------------------
if __name__ == "__main__":
    def build(B, T, S, d_model, nhead, depth, mlp_dim, key):
        k_tgt, k_mem, k_par = jax.random.split(key, 3)
        tgt = jax.random.normal(k_tgt, (B, T, d_model), jnp.float32)
        memory = jax.random.normal(k_mem, (B, S, d_model), jnp.float32)
        raw = [init_layer_params(k, d_model, mlp_dim)
               for k in jax.random.split(k_par, depth)]
        packed = [pack_layer_params(p, d_model, nhead) for p in raw]
        return tgt, memory, raw, packed

    k1, k2 = jax.random.split(jax.random.PRNGKey(0))

    # --- case 1: small shapes, 2 layers, causal flag + key padding mask ---------
    B, T, S, D, H, depth, mlp = 2, 8, 16, 32, 4, 2, 64
    tgt, memory, raw, packed = build(B, T, S, D, H, depth, mlp, k1)
    kpm = jnp.zeros((B, T), jnp.bool_).at[1, -2:].set(True)

    out = transformer_decoder(tgt, memory, packed, H,
                              tgt_key_padding_mask=kpm, tgt_is_causal=True)
    out = jax.block_until_ready(out)
    assert out.shape == (B, T, D)
    ref = ref_transformer_decoder(tgt, memory, raw, H, causal=True, kp_mask=kpm)
    assert jnp.allclose(out, ref, rtol=2e-2, atol=2e-2), "case1 mismatch vs reference"

    # explicit dense tgt_mask path (tiled in-kernel) must agree with the flag path
    causal_bool = jnp.triu(jnp.ones((T, T), jnp.bool_), k=1)
    out2 = transformer_decoder(tgt, memory, packed, H, tgt_mask=causal_bool,
                               tgt_key_padding_mask=kpm)
    out2 = jax.block_until_ready(out2)
    assert jnp.allclose(out, out2, rtol=2e-2, atol=2e-2), "explicit-mask path mismatch"

    # --- case 2: multi-tile flash path (Tq/KV tiling, causal skip, M padding) ---
    B, T, S, D, H, depth, mlp = 2, 384, 200, 128, 2, 1, 512
    tgt, memory, raw, packed = build(B, T, S, D, H, depth, mlp, k2)
    kpm = jnp.zeros((B, T), jnp.bool_).at[1, -64:].set(True)

    out = transformer_decoder(tgt, memory, packed, H,
                              tgt_key_padding_mask=kpm, tgt_is_causal=True)
    out = jax.block_until_ready(out)
    assert out.shape == (B, T, D)
    ref = ref_transformer_decoder(tgt, memory, raw, H, causal=True, kp_mask=kpm)
    assert jnp.allclose(out, ref, rtol=2e-2, atol=2e-2), "case2 mismatch vs reference"

    print("KERNEL_OK")
</pallas_src>

<mosaic_0001>
module attributes {stable_mosaic.version = 11 : i64} {
  func.func @_matmul_kernel(%arg0: i32, %arg1: i32, %arg2: i32, %arg3: memref<16x32xf32, #tpu.memory_space<vmem>>, %arg4: memref<32x96xbf16, #tpu.memory_space<vmem>>, %arg5: memref<1x96xf32, #tpu.memory_space<vmem>>, %arg6: memref<16x96xbf16, #tpu.memory_space<vmem>>, %arg7: memref<16x96xf32, #tpu.memory_space<vmem>>) attributes {dimension_semantics = [#tpu.dimension_semantics<parallel>, #tpu.dimension_semantics<parallel>, #tpu.dimension_semantics<arbitrary>], iteration_bounds = array<i64: 1, 1, 1>, scalar_prefetch = 0 : i64, scratch_operands = 1 : i64, tpu.core_type = #tpu.core_type<tc>, window_params = [{transform_indices = @transform_0, window_bounds = array<i64: 16, 32>}, {transform_indices = @transform_1, window_bounds = array<i64: 32, 96>}, {transform_indices = @transform_2, window_bounds = array<i64: 1, 96>}, {transform_indices = @transform_3, window_bounds = array<i64: 16, 96>}]} {
    %c0_i32 = arith.constant 0 : i32
    %0 = arith.cmpi eq, %arg2, %c0_i32 : i32
    %1 = arith.extui %0 : i1 to i32
    %c0_i32_0 = arith.constant 0 : i32
    %2 = arith.cmpi ne, %1, %c0_i32_0 : i32
    scf.if %2 {
      %cst_10 = arith.constant 0.000000e+00 : f32
      %13 = vector.broadcast %cst_10 : f32 to vector<16x96xf32>
      %c0_11 = arith.constant 0 : index
      %c0_12 = arith.constant 0 : index
      %14 = vector.load %arg7[%c0_11, %c0_12] : memref<16x96xf32, #tpu.memory_space<vmem>>, vector<16x96xf32>
      tpu.vector_store %arg7[%c0_11, %c0_12], %13 {strides = array<i32>} : memref<16x96xf32, #tpu.memory_space<vmem>>, vector<16x96xf32>,
    } else {
    }
    %c0 = arith.constant 0 : index
    %c0_1 = arith.constant 0 : index
    %3 = vector.load %arg7[%c0, %c0_1] : memref<16x96xf32, #tpu.memory_space<vmem>>, vector<16x96xf32>
    %c0_2 = arith.constant 0 : index
    %c0_3 = arith.constant 0 : index
    %4 = vector.load %arg3[%c0_2, %c0_3] : memref<16x32xf32, #tpu.memory_space<vmem>>, vector<16x32xf32>
    %5 = arith.truncf %4 : vector<16x32xf32> to vector<16x32xbf16>
    %c0_4 = arith.constant 0 : index
    %c0_5 = arith.constant 0 : index
    %6 = vector.load %arg4[%c0_4, %c0_5] : memref<32x96xbf16, #tpu.memory_space<vmem>>, vector<32x96xbf16>
    %cst = arith.constant dense<0.000000e+00> : vector<16x96xf32>
    %7 = tpu.matmul %5, %6, %cst {dimension_numbers = #tpu.dot_dimension_numbers<[1], [0], [0], [1], [0, 0, 1, 1], [], []>} : vector<16x32xbf16>, vector<32x96xbf16>, vector<16x96xf32> -> vector<16x96xf32>
    %8 = arith.addf %3, %7 : vector<16x96xf32>
    %c0_6 = arith.constant 0 : index
    %c0_7 = arith.constant 0 : index
    %9 = vector.load %arg7[%c0_6, %c0_7] : memref<16x96xf32, #tpu.memory_space<vmem>>, vector<16x96xf32>
    tpu.vector_store %arg7[%c0_6, %c0_7], %8 {strides = array<i32>} : memref<16x96xf32, #tpu.memory_space<vmem>>, vector<16x96xf32>,
    %c0_i32_8 = arith.constant 0 : i32
    %10 = arith.cmpi eq, %arg2, %c0_i32_8 : i32
    %11 = arith.extui %10 : i1 to i32
    %c0_i32_9 = arith.constant 0 : i32
    %12 = arith.cmpi ne, %11, %c0_i32_9 : i32
    scf.if %12 {
      %c0_10 = arith.constant 0 : index
      %c0_11 = arith.constant 0 : index
      %13 = vector.load %arg7[%c0_10, %c0_11] : memref<16x96xf32, #tpu.memory_space<vmem>>, vector<16x96xf32>
      %c0_12 = arith.constant 0 : index
      %c0_13 = arith.constant 0 : index
      %14 = vector.load %arg5[%c0_12, %c0_13] : memref<1x96xf32, #tpu.memory_space<vmem>>, vector<1x96xf32>
      %15 = vector.broadcast %14 : vector<1x96xf32> to vector<16x96xf32>
      %16 = arith.addf %13, %15 : vector<16x96xf32>
      %17 = arith.truncf %16 : vector<16x96xf32> to vector<16x96xbf16>
      %c0_14 = arith.constant 0 : index
      %c0_15 = arith.constant 0 : index
      %18 = vector.load %arg6[%c0_14, %c0_15] : memref<16x96xbf16, #tpu.memory_space<vmem>>, vector<16x96xbf16>
      tpu.vector_store %arg6[%c0_14, %c0_15], %17 {strides = array<i32>} : memref<16x96xbf16, #tpu.memory_space<vmem>>, vector<16x96xbf16>,
    } else {
    }
    return
  }
  func.func @transform_0(%arg0: i32, %arg1: i32, %arg2: i32) -> (i32, i32) {
    %c0_i32 = arith.constant 0 : i32
    return %arg0, %arg2 : i32, i32
  }
  func.func @transform_1(%arg0: i32, %arg1: i32, %arg2: i32) -> (i32, i32) {
    %c0_i32 = arith.constant 0 : i32
    return %arg2, %arg1 : i32, i32
  }
  func.func @transform_2(%arg0: i32, %arg1: i32, %arg2: i32) -> (i32, i32) {
    %c0_i32 = arith.constant 0 : i32
    %c0_i32_0 = arith.constant 0 : i32
    return %c0_i32, %arg1 : i32, i32
  }
  func.func @transform_3(%arg0: i32, %arg1: i32, %arg2: i32) -> (i32, i32) {
    %c0_i32 = arith.constant 0 : i32
    return %arg0, %arg1 : i32, i32
  }
}

</mosaic_0001>

<llo_original>
// kernel: tpu_custom_call.1
$region0: #{tpu_custom_call.1}
  #allocation0 [shape = 'u32[]', space=smem, size = 0x4, offset = 0x4, fixed_abs, tag = 'smem constant byte address 0x4 - core index']
  #allocation1 [shape = 'u32[144,128]{1,0:T(1,128)}', space=vmem, size = 0x12000, scoped, tag = 'internal scratch']
  #allocation2 [shape = 'f32[16,96]{1,0:T(8,128)}', space=vmem, size = 0x2000, scoped, tag = 'scratch operand']
  %s0 = inlined_call_operand.hbm [shape: f32[16,32], index: 0, kind: input, shape index: {}]
  %s1 = inlined_call_operand.hbm [shape: bf16[32,96], index: 1, kind: input, shape index: {}]
  %s2 = inlined_call_operand.vmem [shape: f32[1,96], index: 2, kind: input, shape index: {}]
  %s3 = inlined_call_operand.hbm [shape: bf16[16,96], index: 3, kind: output, shape index: {}]
  %s4 = sld [smem:[#allocation0]]
  $region38: #{tpu_custom_call.1} parent=0
    _
  %s6 = ssub.s32 1, %s4
  %s7 = scalar_select 0, %s6, %s4
  $region1: #{tpu_custom_call.1} parent=0
    #allocation3 [shape = 'u8[8192]{0}', space=vmem, size = 0x2000, scoped, tag = 'input window, operand 0, single buffered']
    #allocation4 [shape = 's32[1]{0}', space=sflag, size = 0x4, scoped, tag = 'scoped memory for tpu_custom_call.1']
    #allocation5 [shape = 's32[1]{0}', space=sflag, size = 0x4, scoped, tag = 'scoped memory for tpu_custom_call.1']
    #allocation6 [shape = 'u8[8192]{0}', space=vmem, size = 0x2000, scoped, tag = 'input window, operand 1, single buffered']
    #allocation7 [shape = 's32[1]{0}', space=sflag, size = 0x4, scoped, tag = 'scoped memory for tpu_custom_call.1']
    #allocation8 [shape = 'u8[4096]{0}', space=vmem, size = 0x1000, scoped, tag = 'output window, operand 0, single buffered']
    %8 = vsyncpa [#allocation4], 0
    %9 = vsyncpa [#allocation7], 0
    %10 = vsyncpa [#allocation5], 0
    // Predicated region
    $region2: #{tpu_custom_call.1} parent=1 // pred_check
      _
    $region3: #{tpu_custom_call.1} parent=1 // pred_check_branch
      %12 = sbr.rel (0) target = $region5
    $region4: #{tpu_custom_call.1} parent=1 // pred_region
      %s14 = ssub.s32 256, 256
      %15 = vsyncadd [#allocation4], %s14
      %s16 = sshll.u32 [#allocation3], 4
      %s17 = int_to_ptr.vmem [resolvable:$true] %s16
      %22 = dma.hbm_to_vmem [thread:$0]  %s0, 256, %s17, [#allocation4], 128, 128, 8
    $region5: #{tpu_custom_call.1} parent=1 // pred_fallthru
      _
    // Predicated region
    $region6: #{tpu_custom_call.1} parent=1 // pred_check
      _
    $region7: #{tpu_custom_call.1} parent=1 // pred_check_branch
      %24 = sbr.rel (0) target = $region9
    $region8: #{tpu_custom_call.1} parent=1 // pred_region
      %s26 = ssub.s32 256, 256
      %27 = vsyncadd [#allocation7], %s26
      %s28 = sshll.u32 [#allocation6], 4
      %s29 = int_to_ptr.vmem [resolvable:$true] %s28
      %34 = dma.hbm_to_vmem [thread:$0]  %s1, 256, %s29, [#allocation7], 64, 64, 4
    $region9: #{tpu_custom_call.1} parent=1 // pred_fallthru
      _
    // Predicated region
    $region10: #{tpu_custom_call.1} parent=1 // pred_check
      _
    $region11: #{tpu_custom_call.1} parent=1 // pred_check_branch
      %36 = sbr.rel (0) target = $region13
    $region12: #{tpu_custom_call.1} parent=1 // pred_region
      _
    $region13: #{tpu_custom_call.1} parent=1 // pred_fallthru
      _
    // Predicated region
    $region14: #{tpu_custom_call.1} parent=1 // pred_check
      _
    $region15: #{tpu_custom_call.1} parent=1 // pred_check_branch
      %38 = sbr.rel (0) target = $region17
    $region16: #{tpu_custom_call.1} parent=1 // pred_region
      %39 = dma.done [#allocation4], 256
    $region17: #{tpu_custom_call.1} parent=1 // pred_fallthru
      _
    // Predicated region
    $region18: #{tpu_custom_call.1} parent=1 // pred_check
      _
    $region19: #{tpu_custom_call.1} parent=1 // pred_check_branch
      %41 = sbr.rel (0) target = $region21
    $region20: #{tpu_custom_call.1} parent=1 // pred_region
      %42 = dma.done [#allocation7], 256
    $region21: #{tpu_custom_call.1} parent=1 // pred_fallthru
      _
    %p44 = scmp.eq.s32.totalorder 0, 0
    // Predicated region
    $region22: #{tpu_custom_call.1} parent=1 // pred_check
      %p45 = pneg %p44
    $region23: #{tpu_custom_call.1} parent=1 // pred_check_branch
      %47 = sbr.rel (%p45) target = $region25
    $region24: #{tpu_custom_call.1} parent=1 // pred_region
      %vm48 = vcmask 785408
      %49 = vst.msk [vmem:[#allocation2] sm:$0xff] %vm48, 0.0
      %50 = vst.msk [vmem:[#allocation2 + $0x8] sm:$0xff] %vm48, 0.0
    $region25: #{tpu_custom_call.1} parent=1 // pred_fallthru
      _
    %v51 = vld [vmem:[#allocation2] sm:$0xff]
    %v52 = vld [vmem:[#allocation2 + $0x8] sm:$0xff]
    %v53 = vld [vmem:[#allocation3] sm:$0xff]
    %v54 = vld [vmem:[#allocation3 + $0x8] sm:$0xff]
    %v55 = vpack.c.bf16 %v54, %v53
    %v56 = vld [vmem:[#allocation6] sm:$0xf]
    %v57 = vld [vmem:[#allocation6 + $0x4] sm:$0xf]
    %v58 = vld [vmem:[#allocation6 + $0x8] sm:$0xf]
    %v59 = vld [vmem:[#allocation6 + $0xc] sm:$0xf]
    %v64 = vunpack.c.l.b16 %v56
    %v65 = vunpack.c.l.b16 %v57
    %v66 = vunpack.c.l.b16 %v58
    %v67 = vunpack.c.l.b16 %v59
    %v68 = vpack.c.b16 %v65, %v64
    %v69 = vpack.c.b16 %v67, %v66
    %vm72 = vcmask 261120
    %v74 = vsel %vm72, %v55, 0
    %76 = vmatprep.subr.bf16.mxu0 0
    %77 = vmatpush1.bf16.msra.mxu0 0
    %78 = vmatprep.subr.bf16.mxu0 0
    %79 = vmatpush1.bf16.msra.mxu0 0
    %80 = vmatprep.subr.bf16.mxu0 0
    %81 = vmatpush1.bf16.msra.mxu0 0
    %82 = vmatprep.subr.bf16.mxu0 0
    %83 = vmatpush1.bf16.msra.mxu0 0
    %84 = vmatprep.subr.bf16.mxu0 0
    %85 = vmatpush1.bf16.msra.mxu0 0
    %86 = vmatprep.subr.bf16.mxu0 0
    %87 = vmatpush1.bf16.msra.mxu0 0
    %88 = vmatprep.subr.bf16.mxu0 0
    %89 = vmatpush1.bf16.msra.mxu0 %v69
    %90 = vmatprep.subr.bf16.mxu0 0
    %91 = vmatpush1.bf16.msra.mxu0 %v68
    %92 = vmatprep.subr.bf16.mxu0 0
    %93 = vmatpush2.bf16.msra.mxu0 0
    %94 = vmatprep.subr.bf16.mxu0 0
    %95 = vmatpush2.bf16.msra.mxu0 0
    %96 = vmatprep.subr.bf16.mxu0 0
    %97 = vmatpush2.bf16.msra.mxu0 0
    %98 = vmatprep.subr.bf16.mxu0 0
    %99 = vmatpush2.bf16.msra.mxu0 0
    %100 = vmatprep.subr.bf16.mxu0 0
    %101 = vmatpush2.bf16.msra.mxu0 0
    %102 = vmatprep.subr.bf16.mxu0 0
    %103 = vmatpush2.bf16.msra.mxu0 0
    %104 = vmatprep.subr.bf16.mxu0 0
    %105 = vmatpush2.bf16.msra.mxu0 0
    %106 = vmatprep.subr.bf16.mxu0 0
    %107 = vmatpush2.bf16.msra.mxu0 0
    %108 = vmatprep.mubr.bf16.mxu0 0
    %109 = vmatmul.mubr.bf16.gmra.mxu0 %v74
    %v110 = vpop.f32.mrf.mxu0
    %v111 = vadd.f32 0.0, %v110
    %v112 = vpop.f32.mrf.mxu0
    %v113 = vpop.f32.mrf.mxu0
    %v114 = vadd.f32 0.0, %v113
    %v115 = vpop.f32.mrf.mxu0
    %116 = vdwg.mxu0
    %v117 = vadd.f32 %v51, %v111
    %v118 = vadd.f32 %v52, %v114
    %vm119 = vcmask 785408
    %120 = vst.msk [vmem:[#allocation2] sm:$0xff] %vm119, %v117
    %121 = vst.msk [vmem:[#allocation2 + $0x8] sm:$0xff] %vm119, %v118
    // Predicated region
    $region26: #{tpu_custom_call.1} parent=1 // pred_check
      %p122 = pneg %p44
    $region27: #{tpu_custom_call.1} parent=1 // pred_check_branch
      %124 = sbr.rel (%p122) target = $region29
    $region28: #{tpu_custom_call.1} parent=1 // pred_region
      %v125 = vld [vmem:[#allocation2] sm:$0xff]
      %v126 = vld [vmem:[#allocation2 + $0x8] sm:$0xff]
      %v127 = vld [vmem:[%s2] sm:$0x1]
      %v129 = vlaneseq
      %v130 = vshrl.u32 %v129, 7
      %v131 = vsub.s32 0, %v130
      %v132 = vrot.slane %v127, %v131
      %v134 = vadd.f32 %v125, %v132
      %v135 = vadd.f32 %v126, %v132
      %v136 = vpack.c.bf16 %v135, %v134
      %v138 = vunpack.c.l.b16 %v136
      %v139 = vunpack.c.h.b16 %v136
      %v140 = vpack.c.b16 %v138, %v138
      %v141 = vpack.c.b16 %v139, %v139
      %vm144 = vcmask 781312
      %145 = vst.msk [vmem:[#allocation8] sm:$0xf] %vm144, %v140
      %146 = vst.msk [vmem:[#allocation8 + $0x4] sm:$0xf] %vm144, %v141
    $region29: #{tpu_custom_call.1} parent=1 // pred_fallthru
      _
    // Predicated region
    $region30: #{tpu_custom_call.1} parent=1 // pred_check
      _
    $region31: #{tpu_custom_call.1} parent=1 // pred_check_branch
      %148 = sbr.rel (0) target = $region33
    $region32: #{tpu_custom_call.1} parent=1 // pred_region
      %s150 = ssub.s32 128, 128
      %151 = vsyncadd [#allocation5], %s150
      %s152 = sshll.u32 [#allocation8], 4
      %s153 = int_to_ptr.vmem [resolvable:$true] %s152
      %158 = dma.vmem_to_hbm [thread:$0]  %s153, 128, %s3, [#allocation5], 64, 64, 4
    $region33: #{tpu_custom_call.1} parent=1 // pred_fallthru
      _
    // Predicated region
    $region34: #{tpu_custom_call.1} parent=1 // pred_check
      _
    $region35: #{tpu_custom_call.1} parent=1 // pred_check_branch
      %160 = sbr.rel (0) target = $region37
    $region36: #{tpu_custom_call.1} parent=1 // pred_region
      %161 = dma.done [#allocation5], 128
    $region37: #{tpu_custom_call.1} parent=1 // pred_fallthru
      _
    %162 = vsyncpa [#allocation4], 1
    %163 = vsyncpa [#allocation7], 1
    %164 = vsyncpa [#allocation5], 1

</llo_original>
